<compile_context>
chip_gen: v7x
topology: tpu7x:2x2x1
jax: 0.10.0
libtpu: 0.0.40
codegen_flags: <defaults>
</compile_context>

<pallas_src>
import functools
import numpy as np
import jax
import jax.numpy as jnp
from jax.experimental import pallas as pl
from jax.experimental.pallas import tpu as pltpu


_KRON_MAX_D = 256                 # fused Kronecker-DFT path when ph*pw <= this
_MAX_ROWS_PER_BLOCK = 2048        # cap on flattened patches per grid step (kron)
_MAX_PATCHES_PER_BLOCK = 256      # cap on patches per grid step (separable)
_FALLBACK_VMEM_BYTES = 64 * 1024 * 1024   # v7x per-core physical (safe everywhere)


def _round_up(x, k):
    return -(-x // k) * k


@functools.lru_cache(maxsize=1)
def _vmem_budget_bytes():
    """Generation-aware scoped-VMEM budget; also used as vmem_limit_bytes."""
    try:
        phys = int(pltpu.get_tpu_info().vmem_capacity_bytes)
    except Exception:
        phys = _FALLBACK_VMEM_BYTES
    phys = max(phys, 32 * 1024 * 1024)
    # 3/4 of physical: ~96 MiB on v5e/v6e (128 MiB), ~48 MiB on v7x (64 MiB).
    return min((phys * 3) // 4, 96 * 1024 * 1024)


# ---------------------------------------------------------------------------
# DFT matrix construction (host-side numpy).
# ---------------------------------------------------------------------------
def _dft_matrix(n):
    """Ortho-normalized (symmetric) DFT matrix, real / imaginary parts."""
    k = np.arange(n)
    ang = -2.0 * np.pi * np.outer(k, k) / n
    scale = 1.0 / np.sqrt(n)
    return np.cos(ang) * scale, np.sin(ang) * scale


def _kron_dft_matrices(ph, pw):
    """(ph*pw, ph*pw) matrices G so that for a row-major flattened real patch
    d: fft2(d, norm='ortho').flatten() == d_flat @ (Gr + i*Gi)."""
    fhr, fhi = _dft_matrix(ph)
    fwr, fwi = _dft_matrix(pw)
    gr = np.kron(fhr, fwr) - np.kron(fhi, fwi)
    gi = np.kron(fhr, fwi) + np.kron(fhi, fwr)
    return gr.astype(np.float32), gi.astype(np.float32)


# ---------------------------------------------------------------------------
# Kernels
# ---------------------------------------------------------------------------
def _ffl_kron_kernel(p_ref, t_ref, gr_ref, gi_ref, out_ref, *, alpha,
                     log_matrix, rows_total, block_rows, mask_rows, mxu_dtype):
    """Block of `block_rows` flattened patches -> weighted freq-dist partial sum."""
    # FFT linearity: transform the difference once.
    d = p_ref[...].astype(jnp.float32) - t_ref[...].astype(jnp.float32)

    if mask_rows:
        # Ragged last block: zero rows beyond the true M (replaces jnp.pad).
        row = (jax.lax.broadcasted_iota(jnp.int32, (block_rows, 1), 0)
               + pl.program_id(0) * block_rows)
        d = jnp.where(row < rows_total, d, 0.0)

    dm = d.astype(mxu_dtype)
    # 2-D ortho FFT of every patch: two stationary-RHS MXU matmuls.
    zr = jnp.dot(dm, gr_ref[...], preferred_element_type=jnp.float32)
    zi = jnp.dot(dm, gi_ref[...], preferred_element_type=jnp.float32)

    dist = zr * zr + zi * zi                      # freq_distance, (Mb, D)

    # Spectrum weight matrix (batch_matrix=False: per-patch max norm).
    w = jnp.sqrt(dist)
    if alpha != 1.0:
        w = w ** alpha
    if log_matrix:
        w = jnp.log(w + 1.0)
    mx = jnp.max(w, axis=1, keepdims=True)        # one max per patch (row)
    inv = jnp.where(mx > 0.0, 1.0 / mx, 0.0)      # == torch's isnan -> 0
    w = jnp.clip(w * inv, 0.0, 1.0)

    partial = jnp.sum(w * dist)
    out_ref[...] = jnp.zeros(out_ref.shape, jnp.float32) + partial


def _ffl_sep_kernel(p_ref, t_ref, fhr_ref, fhi_ref, fwr_ref, fwi_ref, out_ref,
                    *, alpha, log_matrix, n_total, block_n, mask_n, mxu_dtype):
    """Batched separable DFT for large patches: B patches per grid step."""
    b, ph, pw = p_ref.shape
    d = p_ref[...].astype(jnp.float32) - t_ref[...].astype(jnp.float32)
    if mask_n:
        idx = (jax.lax.broadcasted_iota(jnp.int32, (b, 1, 1), 0)
               + pl.program_id(0) * block_n)
        d = jnp.where(idx < n_total, d, 0.0)

    # Stage 1 (pw side): one big stationary-RHS matmul over all patch rows.
    dm = d.reshape(b * ph, pw).astype(mxu_dtype)
    ar = jnp.dot(dm, fwr_ref[...], preferred_element_type=jnp.float32)
    ai = jnp.dot(dm, fwi_ref[...], preferred_element_type=jnp.float32)

    # Stage 2 (ph side): work on A^T so the DFT matrix stays a stationary RHS.
    art = jnp.swapaxes(ar.reshape(b, ph, pw), 1, 2).reshape(b * pw, ph)
    ait = jnp.swapaxes(ai.reshape(b, ph, pw), 1, 2).reshape(b * pw, ph)
    art = art.astype(mxu_dtype)
    ait = ait.astype(mxu_dtype)
    zr = (jnp.dot(art, fhr_ref[...], preferred_element_type=jnp.float32)
          - jnp.dot(ait, fhi_ref[...], preferred_element_type=jnp.float32))
    zi = (jnp.dot(art, fhi_ref[...], preferred_element_type=jnp.float32)
          + jnp.dot(ait, fhr_ref[...], preferred_element_type=jnp.float32))

    dist = zr * zr + zi * zi                      # (b*pw, ph) == Z^T, layout OK
    w = jnp.sqrt(dist)
    if alpha != 1.0:
        w = w ** alpha
    if log_matrix:
        w = jnp.log(w + 1.0)
    w3 = w.reshape(b, pw, ph)
    mx = jnp.max(w3, axis=(1, 2), keepdims=True)  # per-patch max
    inv = jnp.where(mx > 0.0, 1.0 / mx, 0.0)
    w3 = jnp.clip(w3 * inv, 0.0, 1.0)

    partial = jnp.sum(w3 * dist.reshape(b, pw, ph))
    out_ref[...] = jnp.zeros(out_ref.shape, jnp.float32) + partial


# ---------------------------------------------------------------------------
# Block-size selection
# ---------------------------------------------------------------------------
def _pick_block_rows(m, d, in_itemsize, g_itemsize, budget):
    """Largest MXU/DMA-friendly patch-row block fitting the VMEM budget."""
    m8 = _round_up(m, 8)
    working = (budget * 2) // 3                       # headroom for compiler temps
    fixed = 2 * 2 * d * d * g_itemsize                # Gr+Gi (worst case 2 buffers)
    per_row = 2 * 2 * d * in_itemsize + 8 * d * 4     # double-buffered p,t + temps
    avail = max(working - fixed, 8 * per_row)
    mb = min(_MAX_ROWS_PER_BLOCK, avail // per_row)
    if mb >= 256:
        mb = (mb // 256) * 256            # match 2x256^2 MXU on v6e/v7x
    elif mb >= 128:
        mb = 128
    else:
        mb = max(8, (mb // 8) * 8)
    mb = min(mb, m8)
    # v7x megacore: keep >= 2 grid steps so ("parallel",) spans both cores.
    if m8 >= 512:
        mb = min(mb, _round_up(m8 // 2, 128))
    return int(mb)


def _pick_block_patches(m, ph, pw, in_itemsize, g_itemsize, budget):
    d = ph * pw
    working = (budget * 2) // 3
    fixed = 2 * 2 * (ph * ph + pw * pw) * g_itemsize
    per_patch = 2 * 2 * d * in_itemsize + 12 * d * 4
    avail = max(working - fixed, per_patch)
    bn = max(1, min(_MAX_PATCHES_PER_BLOCK, avail // per_patch))
    if m >= 2:
        bn = min(bn, _round_up(m, 2) // 2)            # >= 2 grid steps
    if bn >= 8:
        bn = (bn // 8) * 8
    return int(max(1, min(bn, m)))


# ---------------------------------------------------------------------------
# Wrappers
# ---------------------------------------------------------------------------
def _to_patches(x, patch_factor):
    """Matches torch.stack(patch_list, 1): -> (N*pf*pf*C, ph, pw)."""
    N, C, H, W = x.shape
    if patch_factor == 1:
        return x.reshape(N * C, H, W)                 # pure reshape, no HBM copy
    ph, pw = H // patch_factor, W // patch_factor
    # TODO(synk): fold this gather into the kernel index_map for pf>1 to avoid
    # materializing a transposed copy of pred/target in HBM.
    x = x.reshape(N, C, patch_factor, ph, patch_factor, pw)
    x = jnp.transpose(x, (0, 2, 4, 1, 3, 5))
    return x.reshape(N * patch_factor * patch_factor * C, ph, pw)


def _ffl_kron_call(p_flat, t_flat, ph, pw, *, alpha, log_matrix, mxu_dtype):
    M, D = p_flat.shape
    budget = _vmem_budget_bytes()
    g_itemsize = jnp.dtype(mxu_dtype).itemsize
    mb = _pick_block_rows(M, D, p_flat.dtype.itemsize, g_itemsize, budget)
    nb = _round_up(M, mb) // mb
    mask_rows = (M % mb) != 0

    gr, gi = _kron_dft_matrices(ph, pw)
    kernel = functools.partial(
        _ffl_kron_kernel, alpha=alpha, log_matrix=log_matrix,
        rows_total=M, block_rows=mb, mask_rows=mask_rows, mxu_dtype=mxu_dtype)

    def build(single_buffer_consts):
        const_kw = ({"pipeline_mode": pl.Buffered(1)}
                    if single_buffer_consts else {})
        return pl.pallas_call(
            kernel,
            out_shape=jax.ShapeDtypeStruct((nb, 1, 128), jnp.float32),
            grid_spec=pltpu.PrefetchScalarGridSpec(
                num_scalar_prefetch=0,
                grid=(nb,),
                in_specs=[
                    pl.BlockSpec((mb, D), lambda i: (i, 0)),
                    pl.BlockSpec((mb, D), lambda i: (i, 0)),
                    pl.BlockSpec((D, D), lambda i: (0, 0), **const_kw),
                    pl.BlockSpec((D, D), lambda i: (0, 0), **const_kw),
                ],
                out_specs=pl.BlockSpec((1, 1, 128), lambda i: (i, 0, 0)),
            ),
            compiler_params=pltpu.CompilerParams(
                dimension_semantics=("parallel",),
                vmem_limit_bytes=int(budget)),
        )

    args = (p_flat, t_flat, jnp.asarray(gr, mxu_dtype), jnp.asarray(gi, mxu_dtype))
    try:
        partials = build(True)(*args)
    except Exception:
        partials = build(False)(*args)       # older JAX without Buffered(1)
    return jnp.sum(partials[:, 0, 0])


def _ffl_sep_call(p, t, ph, pw, *, alpha, log_matrix, mxu_dtype):
    M = p.shape[0]
    budget = _vmem_budget_bytes()
    g_itemsize = jnp.dtype(mxu_dtype).itemsize
    bn = _pick_block_patches(M, ph, pw, p.dtype.itemsize, g_itemsize, budget)
    nb = _round_up(M, bn) // bn
    mask_n = (M % bn) != 0

    fhr, fhi = _dft_matrix(ph)
    fwr, fwi = _dft_matrix(pw)
    kernel = functools.partial(
        _ffl_sep_kernel, alpha=alpha, log_matrix=log_matrix,
        n_total=M, block_n=bn, mask_n=mask_n, mxu_dtype=mxu_dtype)

    def build(single_buffer_consts):
        const_kw = ({"pipeline_mode": pl.Buffered(1)}
                    if single_buffer_consts else {})
        return pl.pallas_call(
            kernel,
            out_shape=jax.ShapeDtypeStruct((nb, 1, 128), jnp.float32),
            grid_spec=pltpu.PrefetchScalarGridSpec(
                num_scalar_prefetch=0,
                grid=(nb,),
                in_specs=[
                    pl.BlockSpec((bn, ph, pw), lambda i: (i, 0, 0)),
                    pl.BlockSpec((bn, ph, pw), lambda i: (i, 0, 0)),
                    pl.BlockSpec((ph, ph), lambda i: (0, 0), **const_kw),
                    pl.BlockSpec((ph, ph), lambda i: (0, 0), **const_kw),
                    pl.BlockSpec((pw, pw), lambda i: (0, 0), **const_kw),
                    pl.BlockSpec((pw, pw), lambda i: (0, 0), **const_kw),
                ],
                out_specs=pl.BlockSpec((1, 1, 128), lambda i: (i, 0, 0)),
            ),
            compiler_params=pltpu.CompilerParams(
                dimension_semantics=("parallel",),
                vmem_limit_bytes=int(budget)),
        )

    args = (p, t,
            jnp.asarray(fhr, mxu_dtype), jnp.asarray(fhi, mxu_dtype),
            jnp.asarray(fwr, mxu_dtype), jnp.asarray(fwi, mxu_dtype))
    try:
        partials = build(True)(*args)
    except Exception:
        partials = build(False)(*args)
    return jnp.sum(partials[:, 0, 0])


def focal_frequency_loss(pred, target, matrix=None, *, loss_weight=1.0,
                         alpha=1.0, patch_factor=1, ave_spectrum=False,
                         log_matrix=False, batch_matrix=False,
                         use_bf16_matmul=False):
    # TODO(synk): ave_spectrum / batch_matrix / externally supplied `matrix`
    # need a cross-patch statistics pass; only the default config is kernelized.
    assert matrix is None and not ave_spectrum and not batch_matrix

    N, C, H, W = pred.shape
    assert H % patch_factor == 0 and W % patch_factor == 0
    ph, pw = H // patch_factor, W // patch_factor
    M = N * patch_factor * patch_factor * C
    D = ph * pw
    mxu_dtype = jnp.bfloat16 if use_bf16_matmul else jnp.float32

    p = _to_patches(pred, patch_factor)
    t = _to_patches(target, patch_factor)

    if D <= _KRON_MAX_D:
        total = _ffl_kron_call(p.reshape(M, D), t.reshape(M, D), ph, pw,
                               alpha=alpha, log_matrix=log_matrix,
                               mxu_dtype=mxu_dtype)
    else:
        total = _ffl_sep_call(p, t, ph, pw, alpha=alpha, log_matrix=log_matrix,
                              mxu_dtype=mxu_dtype)

    mean_loss = total / (M * ph * pw)
    return mean_loss * loss_weight


# ---------------------------------------------------------------------------
# Reference & self-test
# ---------------------------------------------------------------------------
def _reference_numpy(pred, target, loss_weight=1.0, alpha=1.0, patch_factor=1):
    pred = np.asarray(pred, np.float64)
    target = np.asarray(target, np.float64)
    N, C, H, W = pred.shape
    ph, pw = H // patch_factor, W // patch_factor

    def patches(x):
        x = x.reshape(N, C, patch_factor, ph, patch_factor, pw)
        x = x.transpose(0, 2, 4, 1, 3, 5)
        return x.reshape(N * patch_factor * patch_factor * C, ph, pw)

    pf_ = np.fft.fft2(patches(pred), norm="ortho")
    tf_ = np.fft.fft2(patches(target), norm="ortho")
    d = pf_ - tf_
    dist = d.real ** 2 + d.imag ** 2
    w = np.sqrt(dist) ** alpha
    mx = w.max(axis=(-2, -1), keepdims=True)
    with np.errstate(invalid="ignore", divide="ignore"):
        w = w / mx
    w = np.nan_to_num(w, nan=0.0, posinf=0.0, neginf=0.0)
    w = np.clip(w, 0.0, 1.0)
    return float(np.mean(w * dist) * loss_weight)


if __name__ == "__main__":
    key = jax.random.PRNGKey(0)
    k1, k2 = jax.random.split(key)
    N, C, H, W = 2, 4, 16, 16
    pred = jax.random.normal(k1, (N, C, H, W), dtype=jnp.float32)
    target = jax.random.normal(k2, (N, C, H, W), dtype=jnp.float32)

    # Default config (patch_factor=1, f32 MXU path).
    loss = jax.block_until_ready(focal_frequency_loss(pred, target))
    ref = _reference_numpy(np.asarray(pred), np.asarray(target))
    assert np.isfinite(float(loss))
    np.testing.assert_allclose(float(loss), ref, rtol=1e-4, atol=1e-5)

    # Patch-based variant exercises the patch extraction + D=64 kron path.
    loss_p = jax.block_until_ready(
        focal_frequency_loss(pred, target, patch_factor=2))
    ref_p = _reference_numpy(np.asarray(pred), np.asarray(target),
                             patch_factor=2)
    np.testing.assert_allclose(float(loss_p), ref_p, rtol=1e-4, atol=1e-5)

    # Ragged M (15 patches, not a multiple of 8) exercises the in-kernel row
    # mask that replaced the host-side jnp.pad of pred/target.
    k3, k4 = jax.random.split(k2)
    pred_r = jax.random.normal(k3, (3, 5, 16, 16), dtype=jnp.float32)
    target_r = jax.random.normal(k4, (3, 5, 16, 16), dtype=jnp.float32)
    loss_r = jax.block_until_ready(focal_frequency_loss(pred_r, target_r))
    ref_r = _reference_numpy(np.asarray(pred_r), np.asarray(target_r))
    np.testing.assert_allclose(float(loss_r), ref_r, rtol=1e-4, atol=1e-5)

    # bf16-MXU fast path (v6e/v7x): looser tolerance, f32 accumulation.
    loss_bf16 = jax.block_until_ready(
        focal_frequency_loss(pred, target, use_bf16_matmul=True))
    np.testing.assert_allclose(float(loss_bf16), ref, rtol=5e-2, atol=5e-3)

    print("KERNEL_OK")
</pallas_src>

<mosaic_0001>
module attributes {stable_mosaic.version = 11 : i64} {
  func.func @_ffl_kron_kernel(%arg0: i32, %arg1: memref<8x256xf32, #tpu.memory_space<vmem>>, %arg2: memref<8x256xf32, #tpu.memory_space<vmem>>, %arg3: memref<256x256xf32, #tpu.memory_space<vmem>>, %arg4: memref<256x256xf32, #tpu.memory_space<vmem>>, %arg5: memref<1x1x128xf32, #tpu.memory_space<vmem>>) attributes {dimension_semantics = [#tpu.dimension_semantics<parallel>], iteration_bounds = array<i64: 1>, scalar_prefetch = 0 : i64, scratch_operands = 0 : i64, tpu.core_type = #tpu.core_type<tc>, window_params = [{transform_indices = @transform_0, window_bounds = array<i64: 8, 256>}, {transform_indices = @transform_1, window_bounds = array<i64: 8, 256>}, {pipeline_mode = #tpu.pipeline_mode<synchronous>, transform_indices = @transform_2, window_bounds = array<i64: 256, 256>}, {pipeline_mode = #tpu.pipeline_mode<synchronous>, transform_indices = @transform_3, window_bounds = array<i64: 256, 256>}, {transform_indices = @transform_4, window_bounds = array<i64: 1, 1, 128>}]} {
    %c0 = arith.constant 0 : index
    %c0_0 = arith.constant 0 : index
    %0 = vector.load %arg1[%c0, %c0_0] : memref<8x256xf32, #tpu.memory_space<vmem>>, vector<8x256xf32>
    %c0_1 = arith.constant 0 : index
    %c0_2 = arith.constant 0 : index
    %1 = vector.load %arg2[%c0_1, %c0_2] : memref<8x256xf32, #tpu.memory_space<vmem>>, vector<8x256xf32>
    %2 = arith.subf %0, %1 : vector<8x256xf32>
    %c0_3 = arith.constant 0 : index
    %c0_4 = arith.constant 0 : index
    %3 = vector.load %arg3[%c0_3, %c0_4] : memref<256x256xf32, #tpu.memory_space<vmem>>, vector<256x256xf32>
    %cst = arith.constant dense<0.000000e+00> : vector<8x256xf32>
    %4 = tpu.matmul %2, %3, %cst {dimension_numbers = #tpu.dot_dimension_numbers<[1], [0], [0], [1], [0, 0, 1, 1], [], []>} : vector<8x256xf32>, vector<256x256xf32>, vector<8x256xf32> -> vector<8x256xf32>
    %c0_5 = arith.constant 0 : index
    %c0_6 = arith.constant 0 : index
    %5 = vector.load %arg4[%c0_5, %c0_6] : memref<256x256xf32, #tpu.memory_space<vmem>>, vector<256x256xf32>
    %cst_7 = arith.constant dense<0.000000e+00> : vector<8x256xf32>
    %6 = tpu.matmul %2, %5, %cst_7 {dimension_numbers = #tpu.dot_dimension_numbers<[1], [0], [0], [1], [0, 0, 1, 1], [], []>} : vector<8x256xf32>, vector<256x256xf32>, vector<8x256xf32> -> vector<8x256xf32>
    %7 = arith.mulf %4, %4 : vector<8x256xf32>
    %8 = arith.mulf %6, %6 : vector<8x256xf32>
    %9 = arith.addf %7, %8 : vector<8x256xf32>
    %10 = math.sqrt %9 : vector<8x256xf32>
    %cst_8 = arith.constant dense<0xFF800000> : vector<8xf32>
    %11 = vector.multi_reduction <maximumf>, %10, %cst_8 [1] : vector<8x256xf32> to vector<8xf32>
    %12 = vector.shape_cast %11 : vector<8xf32> to vector<8x1xf32>
    %cst_9 = arith.constant 0.000000e+00 : f32
    %13 = vector.broadcast %cst_9 : f32 to vector<8x1xf32>
    %14 = arith.cmpf ogt, %12, %13 : vector<8x1xf32>
    %cst_10 = arith.constant 1.000000e+00 : f32
    %15 = vector.broadcast %cst_10 : f32 to vector<8x1xf32>
    %16 = arith.divf %15, %12 : vector<8x1xf32>
    %cst_11 = arith.constant 0.000000e+00 : f32
    %17 = vector.broadcast %cst_11 : f32 to vector<8x1xf32>
    %18 = arith.select %14, %16, %17 : vector<8x1xi1>, vector<8x1xf32>
    %19 = vector.broadcast %18 : vector<8x1xf32> to vector<8x256xf32>
    %20 = arith.mulf %10, %19 : vector<8x256xf32>
    %cst_12 = arith.constant 0.000000e+00 : f32
    %cst_13 = arith.constant 1.000000e+00 : f32
    %21 = vector.broadcast %cst_12 : f32 to vector<8x256xf32>
    %22 = arith.maximumf %21, %20 : vector<8x256xf32>
    %23 = vector.broadcast %cst_13 : f32 to vector<8x256xf32>
    %24 = arith.minimumf %23, %22 : vector<8x256xf32>
    %25 = arith.mulf %24, %9 : vector<8x256xf32>
    %26 = vector.shape_cast %25 : vector<8x256xf32> to vector<1x8x256xf32>
    %cst_14 = arith.constant dense<0.000000e+00> : vector<1xf32>
    %27 = vector.multi_reduction <add>, %26, %cst_14 [1, 2] : vector<1x8x256xf32> to vector<1xf32>
    %28 = vector.shape_cast %27 : vector<1xf32> to vector<1x1x1xf32>
    %29 = vector.extract %28[0, 0, 0] : f32 from vector<1x1x1xf32>
    %cst_15 = arith.constant 0.000000e+00 : f32
    %30 = vector.broadcast %cst_15 : f32 to vector<1x1x128xf32>
    %31 = vector.broadcast %29 : f32 to vector<1x1x128xf32>
    %32 = arith.addf %30, %31 : vector<1x1x128xf32>
    %c0_16 = arith.constant 0 : index
    %c0_17 = arith.constant 0 : index
    %c0_18 = arith.constant 0 : index
    %33 = vector.load %arg5[%c0_16, %c0_17, %c0_18] : memref<1x1x128xf32, #tpu.memory_space<vmem>>, vector<1x1x128xf32>
    tpu.vector_store %arg5[%c0_16, %c0_17, %c0_18], %32 {strides = array<i32>} : memref<1x1x128xf32, #tpu.memory_space<vmem>>, vector<1x1x128xf32>,
    return
  }
  func.func @transform_0(%arg0: i32) -> (i32, i32) {
    %c0_i32 = arith.constant 0 : i32
    %c0_i32_0 = arith.constant 0 : i32
    return %arg0, %c0_i32 : i32, i32
  }
  func.func @transform_1(%arg0: i32) -> (i32, i32) {
    %c0_i32 = arith.constant 0 : i32
    %c0_i32_0 = arith.constant 0 : i32
    return %arg0, %c0_i32 : i32, i32
  }
  func.func @transform_2(%arg0: i32) -> (i32, i32) {
    %c0_i32 = arith.constant 0 : i32
    %c0_i32_0 = arith.constant 0 : i32
    %c0_i32_1 = arith.constant 0 : i32
    return %c0_i32, %c0_i32_0 : i32, i32
  }
  func.func @transform_3(%arg0: i32) -> (i32, i32) {
    %c0_i32 = arith.constant 0 : i32
    %c0_i32_0 = arith.constant 0 : i32
    %c0_i32_1 = arith.constant 0 : i32
    return %c0_i32, %c0_i32_0 : i32, i32
  }
  func.func @transform_4(%arg0: i32) -> (i32, i32, i32) {
    %c0_i32 = arith.constant 0 : i32
    %c0_i32_0 = arith.constant 0 : i32
    %c0_i32_1 = arith.constant 0 : i32
    return %arg0, %c0_i32, %c0_i32_0 : i32, i32, i32
  }
}

module attributes {stable_mosaic.version = 11 : i64} {
  func.func @_ffl_kron_kernel(%arg0: i32, %arg1: memref<8x256xf32, #tpu.memory_space<vmem>>, %arg2: memref<8x256xf32, #tpu.memory_space<vmem>>, %arg3: memref<256x256xf32, #tpu.memory_space<vmem>>, %arg4: memref<256x256xf32, #tpu.memory_space<vmem>>, %arg5: memref<1x1x128xf32, #tpu.memory_space<vmem>>) attributes {dimension_semantics = [#tpu.dimension_semantics<parallel>], iteration_bounds = array<i64: 1>, scalar_prefetch = 0 : i64, scratch_operands = 0 : i64, tpu.core_type = #tpu.core_type<tc>, window_params = [{transform_indices = @transform_0, window_bounds = array<i64: 8, 256>}, {transform_indices = @transform_1, window_bounds = array<i64: 8, 256>}, {pipeline_mode = #tpu.pipeline_mode<synchronous>, transform_indices = @transform_2, window_bounds = array<i64: 256, 256>}, {pipeline_mode = #tpu.pipeline_mode<synchronous>, transform_indices = @transform_3, window_bounds = array<i64: 256, 256>}, {transform_indices = @transform_4, window_bounds = array<i64: 1, 1, 128>}]} {
    %c0 = arith.constant 0 : index
    %c0_0 = arith.constant 0 : index
    %0 = vector.load %arg1[%c0, %c0_0] : memref<8x256xf32, #tpu.memory_space<vmem>>, vector<8x256xf32>
    %c0_1 = arith.constant 0 : index
    %c0_2 = arith.constant 0 : index
    %1 = vector.load %arg2[%c0_1, %c0_2] : memref<8x256xf32, #tpu.memory_space<vmem>>, vector<8x256xf32>
    %2 = arith.subf %0, %1 : vector<8x256xf32>
    %c0_3 = arith.constant 0 : index
    %c0_4 = arith.constant 0 : index
    %3 = vector.load %arg3[%c0_3, %c0_4] : memref<256x256xf32, #tpu.memory_space<vmem>>, vector<256x256xf32>
    %cst = arith.constant dense<0.000000e+00> : vector<8x256xf32>
    %4 = tpu.matmul %2, %3, %cst {dimension_numbers = #tpu.dot_dimension_numbers<[1], [0], [0], [1], [0, 0, 1, 1], [], []>} : vector<8x256xf32>, vector<256x256xf32>, vector<8x256xf32> -> vector<8x256xf32>
    %c0_5 = arith.constant 0 : index
    %c0_6 = arith.constant 0 : index
    %5 = vector.load %arg4[%c0_5, %c0_6] : memref<256x256xf32, #tpu.memory_space<vmem>>, vector<256x256xf32>
    %cst_7 = arith.constant dense<0.000000e+00> : vector<8x256xf32>
    %6 = tpu.matmul %2, %5, %cst_7 {dimension_numbers = #tpu.dot_dimension_numbers<[1], [0], [0], [1], [0, 0, 1, 1], [], []>} : vector<8x256xf32>, vector<256x256xf32>, vector<8x256xf32> -> vector<8x256xf32>
    %7 = arith.mulf %4, %4 : vector<8x256xf32>
    %8 = arith.mulf %6, %6 : vector<8x256xf32>
    %9 = arith.addf %7, %8 : vector<8x256xf32>
    %10 = math.sqrt %9 : vector<8x256xf32>
    %cst_8 = arith.constant dense<0xFF800000> : vector<8xf32>
    %11 = vector.multi_reduction <maximumf>, %10, %cst_8 [1] : vector<8x256xf32> to vector<8xf32>
    %12 = vector.shape_cast %11 : vector<8xf32> to vector<8x1xf32>
    %cst_9 = arith.constant 0.000000e+00 : f32
    %13 = vector.broadcast %cst_9 : f32 to vector<8x1xf32>
    %14 = arith.cmpf ogt, %12, %13 : vector<8x1xf32>
    %cst_10 = arith.constant 1.000000e+00 : f32
    %15 = vector.broadcast %cst_10 : f32 to vector<8x1xf32>
    %16 = arith.divf %15, %12 : vector<8x1xf32>
    %cst_11 = arith.constant 0.000000e+00 : f32
    %17 = vector.broadcast %cst_11 : f32 to vector<8x1xf32>
    %18 = arith.select %14, %16, %17 : vector<8x1xi1>, vector<8x1xf32>
    %19 = vector.broadcast %18 : vector<8x1xf32> to vector<8x256xf32>
    %20 = arith.mulf %10, %19 : vector<8x256xf32>
    %cst_12 = arith.constant 0.000000e+00 : f32
    %cst_13 = arith.constant 1.000000e+00 : f32
    %21 = vector.broadcast %cst_12 : f32 to vector<8x256xf32>
    %22 = arith.maximumf %21, %20 : vector<8x256xf32>
    %23 = vector.broadcast %cst_13 : f32 to vector<8x256xf32>
    %24 = arith.minimumf %23, %22 : vector<8x256xf32>
    %25 = arith.mulf %24, %9 : vector<8x256xf32>
    %26 = vector.shape_cast %25 : vector<8x256xf32> to vector<1x8x256xf32>
    %cst_14 = arith.constant dense<0.000000e+00> : vector<1xf32>
    %27 = vector.multi_reduction <add>, %26, %cst_14 [1, 2] : vector<1x8x256xf32> to vector<1xf32>
    %28 = vector.shape_cast %27 : vector<1xf32> to vector<1x1x1xf32>
    %29 = vector.extract %28[0, 0, 0] : f32 from vector<1x1x1xf32>
    %cst_15 = arith.constant 0.000000e+00 : f32
    %30 = vector.broadcast %cst_15 : f32 to vector<1x1x128xf32>
    %31 = vector.broadcast %29 : f32 to vector<1x1x128xf32>
    %32 = arith.addf %30, %31 : vector<1x1x128xf32>
    %c0_16 = arith.constant 0 : index
    %c0_17 = arith.constant 0 : index
    %c0_18 = arith.constant 0 : index
    %33 = vector.load %arg5[%c0_16, %c0_17, %c0_18] : memref<1x1x128xf32, #tpu.memory_space<vmem>>, vector<1x1x128xf32>
    tpu.vector_store %arg5[%c0_16, %c0_17, %c0_18], %32 {strides = array<i32>} : memref<1x1x128xf32, #tpu.memory_space<vmem>>, vector<1x1x128xf32>,
    return
  }
  func.func @transform_0(%arg0: i32) -> (i32, i32) {
    %c0_i32 = arith.constant 0 : i32
    %c0_i32_0 = arith.constant 0 : i32
    return %arg0, %c0_i32 : i32, i32
  }
  func.func @transform_1(%arg0: i32) -> (i32, i32) {
    %c0_i32 = arith.constant 0 : i32
    %c0_i32_0 = arith.constant 0 : i32
    return %arg0, %c0_i32 : i32, i32
  }
  func.func @transform_2(%arg0: i32) -> (i32, i32) {
    %c0_i32 = arith.constant 0 : i32
    %c0_i32_0 = arith.constant 0 : i32
    %c0_i32_1 = arith.constant 0 : i32
    return %c0_i32, %c0_i32_0 : i32, i32
  }
  func.func @transform_3(%arg0: i32) -> (i32, i32) {
    %c0_i32 = arith.constant 0 : i32
    %c0_i32_0 = arith.constant 0 : i32
    %c0_i32_1 = arith.constant 0 : i32
    return %c0_i32, %c0_i32_0 : i32, i32
  }
  func.func @transform_4(%arg0: i32) -> (i32, i32, i32) {
    %c0_i32 = arith.constant 0 : i32
    %c0_i32_0 = arith.constant 0 : i32
    %c0_i32_1 = arith.constant 0 : i32
    return %arg0, %c0_i32, %c0_i32_0 : i32, i32, i32
  }
}

</mosaic_0001>

<llo_original>
// kernel: tpu_custom_call.1
$region0: #{tpu_custom_call.1}
  #allocation0 [shape = 'u32[]', space=smem, size = 0x4, offset = 0x4, fixed_abs, tag = 'smem constant byte address 0x4 - core index']
  #allocation1 [shape = 'u32[144,128]{1,0:T(1,128)}', space=vmem, size = 0x12000, scoped, tag = 'internal scratch']
  %s0 = inlined_call_operand.hbm [shape: f32[8,256], index: 0, kind: input, shape index: {}]
  %s1 = inlined_call_operand.hbm [shape: f32[8,256], index: 1, kind: input, shape index: {}]
  %s2 = inlined_call_operand.hbm [shape: f32[256,256], index: 2, kind: input, shape index: {}]
  %s3 = inlined_call_operand.hbm [shape: f32[256,256], index: 3, kind: input, shape index: {}]
  %s4 = inlined_call_operand.hbm [shape: f32[1,1,128], index: 4, kind: output, shape index: {}]
  %s5 = sld [smem:[#allocation0]]
  $region42: #{tpu_custom_call.1} parent=0
    _
  %s7 = ssub.s32 1, %s5
  %s8 = scalar_select 0, %s7, %s5
  $region1: #{tpu_custom_call.1} parent=0
    #allocation2 [shape = 'u8[8192]{0}', space=vmem, size = 0x2000, scoped, tag = 'input window, operand 0, single buffered']
    #allocation3 [shape = 's32[1]{0}', space=sflag, size = 0x4, scoped, tag = 'scoped memory for tpu_custom_call.1']
    #allocation4 [shape = 's32[1]{0}', space=sflag, size = 0x4, scoped, tag = 'scoped memory for tpu_custom_call.1']
    #allocation5 [shape = 'u8[8192]{0}', space=vmem, size = 0x2000, scoped, tag = 'input window, operand 1, single buffered']
    #allocation6 [shape = 's32[1]{0}', space=sflag, size = 0x4, scoped, tag = 'scoped memory for tpu_custom_call.1']
    #allocation7 [shape = 'u8[262144]{0}', space=vmem, size = 0x40000, scoped, tag = 'input window, operand 2, single buffered']
    #allocation8 [shape = 'u8[262144]{0}', space=vmem, size = 0x40000, scoped, tag = 'input window, operand 3, single buffered']
    #allocation9 [shape = 's32[1]{0}', space=sflag, size = 0x4, scoped, tag = 'scoped memory for tpu_custom_call.1']
    #allocation10 [shape = 'u8[512]{0}', space=vmem, size = 0x400, scoped, tag = 'output window, operand 0, single buffered']
    %9 = vsyncpa [#allocation3], 0
    %10 = vsyncpa [#allocation6], 0
    %11 = vsyncpa [#allocation9], 0
    %12 = vsyncpa [#allocation4], 0
    // Predicated region
    $region2: #{tpu_custom_call.1} parent=1 // pred_check
      _
    $region3: #{tpu_custom_call.1} parent=1 // pred_check_branch
      %14 = sbr.rel (0) target = $region5
    $region4: #{tpu_custom_call.1} parent=1 // pred_region
      %s16 = ssub.s32 256, 256
      %17 = vsyncadd [#allocation3], %s16
      %s19 = sshll.u32 [#allocation2], 4
      %s20 = int_to_ptr.vmem [resolvable:$true] %s19
      %22 = dma.hbm_to_vmem [thread:$0]  %s0, 256, %s20, [#allocation3]
    $region5: #{tpu_custom_call.1} parent=1 // pred_fallthru
      _
    // Predicated region
    $region6: #{tpu_custom_call.1} parent=1 // pred_check
      _
    $region7: #{tpu_custom_call.1} parent=1 // pred_check_branch
      %24 = sbr.rel (0) target = $region9
    $region8: #{tpu_custom_call.1} parent=1 // pred_region
      %s26 = ssub.s32 256, 256
      %27 = vsyncadd [#allocation6], %s26
      %s29 = sshll.u32 [#allocation5], 4
      %s30 = int_to_ptr.vmem [resolvable:$true] %s29
      %32 = dma.hbm_to_vmem [thread:$0]  %s1, 256, %s30, [#allocation6]
    $region9: #{tpu_custom_call.1} parent=1 // pred_fallthru
      _
    // Predicated region
    $region10: #{tpu_custom_call.1} parent=1 // pred_check
      _
    $region11: #{tpu_custom_call.1} parent=1 // pred_check_branch
      %34 = sbr.rel (0) target = $region13
    $region12: #{tpu_custom_call.1} parent=1 // pred_region
      %s36 = ssub.s32 8192, 8192
      %37 = vsyncadd [#allocation6], %s36
      %s38 = sshll.u32 [#allocation7], 4
      %s39 = int_to_ptr.vmem [resolvable:$true] %s38
      %44 = dma.hbm_to_vmem [thread:$0]  %s2, 8192, %s39, [#allocation6], 256, 256, 16
    $region13: #{tpu_custom_call.1} parent=1 // pred_fallthru
      _
    // Predicated region
    $region14: #{tpu_custom_call.1} parent=1 // pred_check
      _
    $region15: #{tpu_custom_call.1} parent=1 // pred_check_branch
      %46 = sbr.rel (0) target = $region17
    $region16: #{tpu_custom_call.1} parent=1 // pred_region
      %s48 = ssub.s32 8192, 8192
      %49 = vsyncadd [#allocation9], %s48
      %s50 = sshll.u32 [#allocation8], 4
      %s51 = int_to_ptr.vmem [resolvable:$true] %s50
      %56 = dma.hbm_to_vmem [thread:$0]  %s3, 8192, %s51, [#allocation9], 256, 256, 16
    $region17: #{tpu_custom_call.1} parent=1 // pred_fallthru
      _
    // Predicated region
    $region18: #{tpu_custom_call.1} parent=1 // pred_check
      _
    $region19: #{tpu_custom_call.1} parent=1 // pred_check_branch
      %58 = sbr.rel (0) target = $region21
    $region20: #{tpu_custom_call.1} parent=1 // pred_region
      %59 = dma.done [#allocation3], 256
    $region21: #{tpu_custom_call.1} parent=1 // pred_fallthru
      _
    // Predicated region
    $region22: #{tpu_custom_call.1} parent=1 // pred_check
      _
    $region23: #{tpu_custom_call.1} parent=1 // pred_check_branch
      %61 = sbr.rel (0) target = $region25
    $region24: #{tpu_custom_call.1} parent=1 // pred_region
      %62 = dma.done [#allocation6], 256
    $region25: #{tpu_custom_call.1} parent=1 // pred_fallthru
      _
    // Predicated region
    $region26: #{tpu_custom_call.1} parent=1 // pred_check
      _
    $region27: #{tpu_custom_call.1} parent=1 // pred_check_branch
      %64 = sbr.rel (0) target = $region29
    $region28: #{tpu_custom_call.1} parent=1 // pred_region
      %65 = dma.done [#allocation6], 8192
    $region29: #{tpu_custom_call.1} parent=1 // pred_fallthru
      _
    // Predicated region
    $region30: #{tpu_custom_call.1} parent=1 // pred_check
      _
    $region31: #{tpu_custom_call.1} parent=1 // pred_check_branch
      %67 = sbr.rel (0) target = $region33
    $region32: #{tpu_custom_call.1} parent=1 // pred_region
      %68 = dma.done [#allocation9], 8192
    $region33: #{tpu_custom_call.1} parent=1 // pred_fallthru
      _
    %v69 = vld [vmem:[#allocation2] sm:$0xff]
    %v70 = vld [vmem:[#allocation2 + $0x8] sm:$0xff]
    %v71 = vld [vmem:[#allocation5] sm:$0xff]
    %v72 = vld [vmem:[#allocation5 + $0x8] sm:$0xff]
    %v73 = vsub.f32 %v69, %v71
    %v74 = vsub.f32 %v70, %v72
    %v75 = vld [vmem:[#allocation7] sm:$0xff]
    %v76 = vld [vmem:[#allocation7 + $0x8] sm:$0xff]
    %v77 = vld [vmem:[#allocation7 + $0x10] sm:$0xff]
    %v78 = vld [vmem:[#allocation7 + $0x18] sm:$0xff]
    %v79 = vld [vmem:[#allocation7 + $0x20] sm:$0xff]
    %v80 = vld [vmem:[#allocation7 + $0x28] sm:$0xff]
    %v81 = vld [vmem:[#allocation7 + $0x30] sm:$0xff]
    %v82 = vld [vmem:[#allocation7 + $0x38] sm:$0xff]
    %v83 = vld [vmem:[#allocation7 + $0x40] sm:$0xff]
    %v84 = vld [vmem:[#allocation7 + $0x48] sm:$0xff]
    %v85 = vld [vmem:[#allocation7 + $0x50] sm:$0xff]
    %v86 = vld [vmem:[#allocation7 + $0x58] sm:$0xff]
    %v87 = vld [vmem:[#allocation7 + $0x60] sm:$0xff]
    %v88 = vld [vmem:[#allocation7 + $0x68] sm:$0xff]
    %v89 = vld [vmem:[#allocation7 + $0x70] sm:$0xff]
    %v90 = vld [vmem:[#allocation7 + $0x78] sm:$0xff]
    %v91 = vld [vmem:[#allocation7 + $0x80] sm:$0xff]
    %v92 = vld [vmem:[#allocation7 + $0x88] sm:$0xff]
    %v93 = vld [vmem:[#allocation7 + $0x90] sm:$0xff]
    %v94 = vld [vmem:[#allocation7 + $0x98] sm:$0xff]
    %v95 = vld [vmem:[#allocation7 + $0xa0] sm:$0xff]
    %v96 = vld [vmem:[#allocation7 + $0xa8] sm:$0xff]
    %v97 = vld [vmem:[#allocation7 + $0xb0] sm:$0xff]
    %v98 = vld [vmem:[#allocation7 + $0xb8] sm:$0xff]
    %v99 = vld [vmem:[#allocation7 + $0xc0] sm:$0xff]
    %v100 = vld [vmem:[#allocation7 + $0xc8] sm:$0xff]
    %v101 = vld [vmem:[#allocation7 + $0xd0] sm:$0xff]
    %v102 = vld [vmem:[#allocation7 + $0xd8] sm:$0xff]
    %v103 = vld [vmem:[#allocation7 + $0xe0] sm:$0xff]
    %v104 = vld [vmem:[#allocation7 + $0xe8] sm:$0xff]
    %v105 = vld [vmem:[#allocation7 + $0xf0] sm:$0xff]
    %v106 = vld [vmem:[#allocation7 + $0xf8] sm:$0xff]
    %v107 = vld [vmem:[#allocation7 + $0x100] sm:$0xff]
    %v108 = vld [vmem:[#allocation7 + $0x108] sm:$0xff]
    %v109 = vld [vmem:[#allocation7 + $0x110] sm:$0xff]
    %v110 = vld [vmem:[#allocation7 + $0x118] sm:$0xff]
    %v111 = vld [vmem:[#allocation7 + $0x120] sm:$0xff]
    %v112 = vld [vmem:[#allocation7 + $0x128] sm:$0xff]
    %v113 = vld [vmem:[#allocation7 + $0x130] sm:$0xff]
    %v114 = vld [vmem:[#allocation7 + $0x138] sm:$0xff]
    %v115 = vld [vmem:[#allocation7 + $0x140] sm:$0xff]
    %v116 = vld [vmem:[#allocation7 + $0x148] sm:$0xff]
    %v117 = vld [vmem:[#allocation7 + $0x150] sm:$0xff]
    %v118 = vld [vmem:[#allocation7 + $0x158] sm:$0xff]
    %v119 = vld [vmem:[#allocation7 + $0x160] sm:$0xff]
    %v120 = vld [vmem:[#allocation7 + $0x168] sm:$0xff]
    %v121 = vld [vmem:[#allocation7 + $0x170] sm:$0xff]
    %v122 = vld [vmem:[#allocation7 + $0x178] sm:$0xff]
    %v123 = vld [vmem:[#allocation7 + $0x180] sm:$0xff]
    %v124 = vld [vmem:[#allocation7 + $0x188] sm:$0xff]
    %v125 = vld [vmem:[#allocation7 + $0x190] sm:$0xff]
    %v126 = vld [vmem:[#allocation7 + $0x198] sm:$0xff]
    %v127 = vld [vmem:[#allocation7 + $0x1a0] sm:$0xff]
    %v128 = vld [vmem:[#allocation7 + $0x1a8] sm:$0xff]
    %v129 = vld [vmem:[#allocation7 + $0x1b0] sm:$0xff]
    %v130 = vld [vmem:[#allocation7 + $0x1b8] sm:$0xff]
    %v131 = vld [vmem:[#allocation7 + $0x1c0] sm:$0xff]
    %v132 = vld [vmem:[#allocation7 + $0x1c8] sm:$0xff]
    %v133 = vld [vmem:[#allocation7 + $0x1d0] sm:$0xff]
    %v134 = vld [vmem:[#allocation7 + $0x1d8] sm:$0xff]
    %v135 = vld [vmem:[#allocation7 + $0x1e0] sm:$0xff]
    %v136 = vld [vmem:[#allocation7 + $0x1e8] sm:$0xff]
    %v137 = vld [vmem:[#allocation7 + $0x1f0] sm:$0xff]
    %v138 = vld [vmem:[#allocation7 + $0x1f8] sm:$0xff]
    %139 = vmatprep.subr.mxu0 %v76
    %140 = vmatpush1.msra.mxu0 %v75
    %141 = vmatprep.subr.mxu0 %v78
    %142 = vmatpush1.msra.mxu0 %v77
    %143 = vmatprep.subr.mxu0 %v80
    %144 = vmatpush1.msra.mxu0 %v79
    %145 = vmatprep.subr.mxu0 %v82
    %146 = vmatpush1.msra.mxu0 %v81
    %147 = vmatprep.subr.mxu0 %v84
    %148 = vmatpush1.msra.mxu0 %v83
    %149 = vmatprep.subr.mxu0 %v86
    %150 = vmatpush1.msra.mxu0 %v85
    %151 = vmatprep.subr.mxu0 %v88
    %152 = vmatpush1.msra.mxu0 %v87
    %153 = vmatprep.subr.mxu0 %v90
    %154 = vmatpush1.msra.mxu0 %v89
    %155 = vmatprep.subr.mxu0 %v92
    %156 = vmatpush1.msra.mxu0 %v91
    %157 = vmatprep.subr.mxu0 %v94
    %158 = vmatpush1.msra.mxu0 %v93
    %159 = vmatprep.subr.mxu0 %v96
    %160 = vmatpush1.msra.mxu0 %v95
    %161 = vmatprep.subr.mxu0 %v98
    %162 = vmatpush1.msra.mxu0 %v97
    %163 = vmatprep.subr.mxu0 %v100
    %164 = vmatpush1.msra.mxu0 %v99
    %165 = vmatprep.subr.mxu0 %v102
    %166 = vmatpush1.msra.mxu0 %v101
    %167 = vmatprep.subr.mxu0 %v104
    %168 = vmatpush1.msra.mxu0 %v103
    %169 = vmatprep.subr.mxu0 %v106
    %170 = vmatpush1.msra.mxu0 %v105
    %171 = vmatprep.subr.mxu0 %v108
    %172 = vmatpush1.msra.mxu0 %v107
    %173 = vmatprep.subr.mxu0 %v110
    %174 = vmatpush1.msra.mxu0 %v109
    %175 = vmatprep.subr.mxu0 %v112
    %176 = vmatpush1.msra.mxu0 %v111
    %177 = vmatprep.subr.mxu0 %v114
    %178 = vmatpush1.msra.mxu0 %v113
    %179 = vmatprep.subr.mxu0 %v116
    %180 = vmatpush1.msra.mxu0 %v115
    %181 = vmatprep.subr.mxu0 %v118
    %182 = vmatpush1.msra.mxu0 %v117
    %183 = vmatprep.subr.mxu0 %v120
    %184 = vmatpush1.msra.mxu0 %v119
    %185 = vmatprep.subr.mxu0 %v122
    %186 = vmatpush1.msra.mxu0 %v121
    %187 = vmatprep.subr.mxu0 %v124
    %188 = vmatpush1.msra.mxu0 %v123
    %189 = vmatprep.subr.mxu0 %v126
    %190 = vmatpush1.msra.mxu0 %v125
    %191 = vmatprep.subr.mxu0 %v128
    %192 = vmatpush1.msra.mxu0 %v127
    %193 = vmatprep.subr.mxu0 %v130
    %194 = vmatpush1.msra.mxu0 %v129
    %195 = vmatprep.subr.mxu0 %v132
    %196 = vmatpush1.msra.mxu0 %v131
    %197 = vmatprep.subr.mxu0 %v134
    %198 = vmatpush1.msra.mxu0 %v133
    %199 = vmatprep.subr.mxu0 %v136
    %200 = vmatpush1.msra.mxu0 %v135
    %201 = vmatprep.subr.mxu0 %v138
    %202 = vmatpush1.msra.mxu0 %v137
    %203 = vmatprep.mubr.f32.mxu0 %v74
    %204 = vmatmul.mubr.f32.gmra.mrb[0].mxu0 %v73
    %v205 = vpop.f32.mrb[0].mxu0
    %v206 = vadd.f32 0.0, %v205
    %v207 = vpop.f32.mrb[0].mxu0
    %v208 = vadd.f32 0.0, %v207
    %209 = vdwg.mxu0
    %v210 = vld [vmem:[#allocation8] sm:$0xff]
    %v211 = vld [vmem:[#allocation8 + $0x8] sm:$0xff]
    %v212 = vld [vmem:[#allocation8 + $0x10] sm:$0xff]
    %v213 = vld [vmem:[#allocation8 + $0x18] sm:$0xff]
    %v214 = vld [vmem:[#allocation8 + $0x20] sm:$0xff]
    %v215 = vld [vmem:[#allocation8 + $0x28] sm:$0xff]
    %v216 = vld [vmem:[#allocation8 + $0x30] sm:$0xff]
    %v217 = vld [vmem:[#allocation8 + $0x38] sm:$0xff]
    %v218 = vld [vmem:[#allocation8 + $0x40] sm:$0xff]
    %v219 = vld [vmem:[#allocation8 + $0x48] sm:$0xff]
    %v220 = vld [vmem:[#allocation8 + $0x50] sm:$0xff]
    %v221 = vld [vmem:[#allocation8 + $0x58] sm:$0xff]
    %v222 = vld [vmem:[#allocation8 + $0x60] sm:$0xff]
    %v223 = vld [vmem:[#allocation8 + $0x68] sm:$0xff]
    %v224 = vld [vmem:[#allocation8 + $0x70] sm:$0xff]
    %v225 = vld [vmem:[#allocation8 + $0x78] sm:$0xff]
    %v226 = vld [vmem:[#allocation8 + $0x80] sm:$0xff]
    %v227 = vld [vmem:[#allocation8 + $0x88] sm:$0xff]
    %v228 = vld [vmem:[#allocation8 + $0x90] sm:$0xff]
    %v229 = vld [vmem:[#allocation8 + $0x98] sm:$0xff]
    %v230 = vld [vmem:[#allocation8 + $0xa0] sm:$0xff]
    %v231 = vld [vmem:[#allocation8 + $0xa8] sm:$0xff]
    %v232 = vld [vmem:[#allocation8 + $0xb0] sm:$0xff]
    %v233 = vld [vmem:[#allocation8 + $0xb8] sm:$0xff]
    %v234 = vld [vmem:[#allocation8 + $0xc0] sm:$0xff]
    %v235 = vld [vmem:[#allocation8 + $0xc8] sm:$0xff]
    %v236 = vld [vmem:[#allocation8 + $0xd0] sm:$0xff]
    %v237 = vld [vmem:[#allocation8 + $0xd8] sm:$0xff]
    %v238 = vld [vmem:[#allocation8 + $0xe0] sm:$0xff]
    %v239 = vld [vmem:[#allocation8 + $0xe8] sm:$0xff]
    %v240 = vld [vmem:[#allocation8 + $0xf0] sm:$0xff]
    %v241 = vld [vmem:[#allocation8 + $0xf8] sm:$0xff]
    %v242 = vld [vmem:[#allocation8 + $0x100] sm:$0xff]
    %v243 = vld [vmem:[#allocation8 + $0x108] sm:$0xff]
    %v244 = vld [vmem:[#allocation8 + $0x110] sm:$0xff]
    %v245 = vld [vmem:[#allocation8 + $0x118] sm:$0xff]
    %v246 = vld [vmem:[#allocation8 + $0x120] sm:$0xff]
    %v247 = vld [vmem:[#allocation8 + $0x128] sm:$0xff]
    %v248 = vld [vmem:[#allocation8 + $0x130] sm:$0xff]
    %v249 = vld [vmem:[#allocation8 + $0x138] sm:$0xff]
    %v250 = vld [vmem:[#allocation8 + $0x140] sm:$0xff]
    %v251 = vld [vmem:[#allocation8 + $0x148] sm:$0xff]
    %v252 = vld [vmem:[#allocation8 + $0x150] sm:$0xff]
    %v253 = vld [vmem:[#allocation8 + $0x158] sm:$0xff]
    %v254 = vld [vmem:[#allocation8 + $0x160] sm:$0xff]
    %v255 = vld [vmem:[#allocation8 + $0x168] sm:$0xff]
    %v256 = vld [vmem:[#allocation8 + $0x170] sm:$0xff]
    %v257 = vld [vmem:[#allocation8 + $0x178] sm:$0xff]
    %v258 = vld [vmem:[#allocation8 + $0x180] sm:$0xff]
    %v259 = vld [vmem:[#allocation8 + $0x188] sm:$0xff]
    %v260 = vld [vmem:[#allocation8 + $0x190] sm:$0xff]
    %v261 = vld [vmem:[#allocation8 + $0x198] sm:$0xff]
    %v262 = vld [vmem:[#allocation8 + $0x1a0] sm:$0xff]
    %v263 = vld [vmem:[#allocation8 + $0x1a8] sm:$0xff]
    %v264 = vld [vmem:[#allocation8 + $0x1b0] sm:$0xff]
    %v265 = vld [vmem:[#allocation8 + $0x1b8] sm:$0xff]
    %v266 = vld [vmem:[#allocation8 + $0x1c0] sm:$0xff]
    %v267 = vld [vmem:[#allocation8 + $0x1c8] sm:$0xff]
    %v268 = vld [vmem:[#allocation8 + $0x1d0] sm:$0xff]
    %v269 = vld [vmem:[#allocation8 + $0x1d8] sm:$0xff]
    %v270 = vld [vmem:[#allocation8 + $0x1e0] sm:$0xff]
    %v271 = vld [vmem:[#allocation8 + $0x1e8] sm:$0xff]
    %v272 = vld [vmem:[#allocation8 + $0x1f0] sm:$0xff]
    %v273 = vld [vmem:[#allocation8 + $0x1f8] sm:$0xff]
    %274 = vmatprep.subr.mxu0 %v211
    %275 = vmatpush1.msra.mxu0 %v210
    %276 = vmatprep.subr.mxu0 %v213
    %277 = vmatpush1.msra.mxu0 %v212
    %278 = vmatprep.subr.mxu0 %v215
    %279 = vmatpush1.msra.mxu0 %v214
    %280 = vmatprep.subr.mxu0 %v217
    %281 = vmatpush1.msra.mxu0 %v216
    %282 = vmatprep.subr.mxu0 %v219
    %283 = vmatpush1.msra.mxu0 %v218
    %284 = vmatprep.subr.mxu0 %v221
    %285 = vmatpush1.msra.mxu0 %v220
    %286 = vmatprep.subr.mxu0 %v223
    %287 = vmatpush1.msra.mxu0 %v222
    %288 = vmatprep.subr.mxu0 %v225
    %289 = vmatpush1.msra.mxu0 %v224
    %290 = vmatprep.subr.mxu0 %v227
    %291 = vmatpush1.msra.mxu0 %v226
    %292 = vmatprep.subr.mxu0 %v229
    %293 = vmatpush1.msra.mxu0 %v228
    %294 = vmatprep.subr.mxu0 %v231
    %295 = vmatpush1.msra.mxu0 %v230
    %296 = vmatprep.subr.mxu0 %v233
    %297 = vmatpush1.msra.mxu0 %v232
    %298 = vmatprep.subr.mxu0 %v235
    %299 = vmatpush1.msra.mxu0 %v234
    %300 = vmatprep.subr.mxu0 %v237
    %301 = vmatpush1.msra.mxu0 %v236
    %302 = vmatprep.subr.mxu0 %v239
    %303 = vmatpush1.msra.mxu0 %v238
    %304 = vmatprep.subr.mxu0 %v241
    %305 = vmatpush1.msra.mxu0 %v240
    %306 = vmatprep.subr.mxu0 %v243
    %307 = vmatpush1.msra.mxu0 %v242
    %308 = vmatprep.subr.mxu0 %v245
    %309 = vmatpush1.msra.mxu0 %v244
    %310 = vmatprep.subr.mxu0 %v247
    %311 = vmatpush1.msra.mxu0 %v246
    %312 = vmatprep.subr.mxu0 %v249
    %313 = vmatpush1.msra.mxu0 %v248
    %314 = vmatprep.subr.mxu0 %v251
    %315 = vmatpush1.msra.mxu0 %v250
    %316 = vmatprep.subr.mxu0 %v253
    %317 = vmatpush1.msra.mxu0 %v252
    %318 = vmatprep.subr.mxu0 %v255
    %319 = vmatpush1.msra.mxu0 %v254
    %320 = vmatprep.subr.mxu0 %v257
    %321 = vmatpush1.msra.mxu0 %v256
    %322 = vmatprep.subr.mxu0 %v259
    %323 = vmatpush1.msra.mxu0 %v258
    %324 = vmatprep.subr.mxu0 %v261
    %325 = vmatpush1.msra.mxu0 %v260
    %326 = vmatprep.subr.mxu0 %v263
    %327 = vmatpush1.msra.mxu0 %v262
    %328 = vmatprep.subr.mxu0 %v265
    %329 = vmatpush1.msra.mxu0 %v264
    %330 = vmatprep.subr.mxu0 %v267
    %331 = vmatpush1.msra.mxu0 %v266
    %332 = vmatprep.subr.mxu0 %v269
    %333 = vmatpush1.msra.mxu0 %v268
    %334 = vmatprep.subr.mxu0 %v271
    %335 = vmatpush1.msra.mxu0 %v270
    %336 = vmatprep.subr.mxu0 %v273
    %337 = vmatpush1.msra.mxu0 %v272
    %338 = vmatprep.mubr.f32.mxu0 %v74
    %339 = vmatmul.mubr.f32.gmra.mrb[0].mxu0 %v73
    %v340 = vpop.f32.mrb[0].mxu0
    %v341 = vadd.f32 0.0, %v340
    %v342 = vpop.f32.mrb[0].mxu0
    %v343 = vadd.f32 0.0, %v342
    %344 = vdwg.mxu0
    %v345 = vmul.f32 %v206, %v206
    %v346 = vmul.f32 %v208, %v208
    %v347 = vmul.f32 %v341, %v341
    %v348 = vmul.f32 %v343, %v343
    %v349 = vadd.f32 %v345, %v347
    %v350 = vadd.f32 %v346, %v348
    %v351 = vrsqrt.pop %v349
    %v352 = vmul.f32 %v349, %v351
    %vm353 = vcmp.eq.f32.partialorder %v349, inf
    %v354 = vsel %vm353, %v349, %v352
    %vm355 = vcmp.eq.f32.partialorder %v349, 0.0
    %v356 = vand.u32 %v349, 2147483648
    %v357 = vsel %vm355, %v356, %v354
    %v358 = vrsqrt.pop %v350
    %v359 = vmul.f32 %v350, %v358
    %vm360 = vcmp.eq.f32.partialorder %v350, inf
    %v361 = vsel %vm360, %v350, %v359
    %vm362 = vcmp.eq.f32.partialorder %v350, 0.0
    %v363 = vand.u32 %v350, 2147483648
    %v364 = vsel %vm362, %v363, %v361
    %v365 = vmax.f32 %v357, %v364
    %366 = vmax.xlane.f32.xlu0 %v365
    %v367 = vpop.xlane.xlu0 %366
    %vm368 = vcmp.gt.f32.partialorder %v367, 0.0
    %v369 = vrcp.pop %v367
    %v370 = vmul.f32 1.0, %v369
    %v371 = vsel %vm368, %v370, 0.0
    %v372 = vmul.f32 %v357, %v371
    %v373 = vmul.f32 %v364, %v371
    %v374 = vmax.f32 %v372, 0.0
    %v375 = vmax.f32 %v373, 0.0
    %v376 = vmin.f32 %v374, 1.0
    %v377 = vmin.f32 %v375, 1.0
    %v378 = vmul.f32 %v376, %v349
    %v379 = vmul.f32 %v377, %v350
    %v380 = vadd.f32 %v378, %v379
    %381 = vadd.xlane.f32.xlu0 %v380
    %v382 = vpop.xlane.xlu0 %381
    %v383 = vrot.slane %v382, 4
    %v384 = vadd.f32 %v382, %v383
    %v385 = vrot.slane %v384, 2
    %v386 = vadd.f32 %v384, %v385
    %v387 = vrot.slane %v386, 1
    %v388 = vadd.f32 %v386, %v387
    %s389 = vtos %v388
    %v390 = vstv %s389
    %v391 = vadd.f32 %v390, 0.0
    %392 = vst [vmem:[#allocation10] sm:$0x1] %v391
    // Predicated region
    $region34: #{tpu_custom_call.1} parent=1 // pred_check
      _
    $region35: #{tpu_custom_call.1} parent=1 // pred_check_branch
      %394 = sbr.rel (0) target = $region37
    $region36: #{tpu_custom_call.1} parent=1 // pred_region
      %s396 = ssub.s32 16, 16
      %397 = vsyncadd [#allocation4], %s396
      %s399 = sshll.u32 [#allocation10], 4
      %s400 = int_to_ptr.vmem [resolvable:$true] %s399
      %402 = dma.vmem_to_hbm [thread:$0]  %s400, 16, %s4, [#allocation4]
    $region37: #{tpu_custom_call.1} parent=1 // pred_fallthru
      _
    // Predicated region
    $region38: #{tpu_custom_call.1} parent=1 // pred_check
      _
    $region39: #{tpu_custom_call.1} parent=1 // pred_check_branch
      %404 = sbr.rel (0) target = $region41
    $region40: #{tpu_custom_call.1} parent=1 // pred_region
      %405 = dma.done [#allocation4], 16
    $region41: #{tpu_custom_call.1} parent=1 // pred_fallthru
      _
    %406 = vsyncpa [#allocation3], 1
    %407 = vsyncpa [#allocation6], 1
    %408 = vsyncpa [#allocation9], 1
    %409 = vsyncpa [#allocation4], 1

// kernel: tpu_custom_call.1
$region0: #{tpu_custom_call.1}
  #allocation0 [shape = 'u32[]', space=smem, size = 0x4, offset = 0x4, fixed_abs, tag = 'smem constant byte address 0x4 - core index']
  #allocation1 [shape = 'u32[144,128]{1,0:T(1,128)}', space=vmem, size = 0x12000, scoped, tag = 'internal scratch']
  %s0 = inlined_call_operand.hbm [shape: f32[8,256], index: 0, kind: input, shape index: {}]
  %s1 = inlined_call_operand.hbm [shape: f32[8,256], index: 1, kind: input, shape index: {}]
  %s2 = inlined_call_operand.hbm [shape: f32[256,256], index: 2, kind: input, shape index: {}]
  %s3 = inlined_call_operand.hbm [shape: f32[256,256], index: 3, kind: input, shape index: {}]
  %s4 = inlined_call_operand.hbm [shape: f32[1,1,128], index: 4, kind: output, shape index: {}]
  %s5 = sld [smem:[#allocation0]]
  $region42: #{tpu_custom_call.1} parent=0
    _
  %s7 = ssub.s32 1, %s5
  %s8 = scalar_select 0, %s7, %s5
  $region1: #{tpu_custom_call.1} parent=0
    #allocation2 [shape = 'u8[8192]{0}', space=vmem, size = 0x2000, scoped, tag = 'input window, operand 0, single buffered']
    #allocation3 [shape = 's32[1]{0}', space=sflag, size = 0x4, scoped, tag = 'scoped memory for tpu_custom_call.1']
    #allocation4 [shape = 's32[1]{0}', space=sflag, size = 0x4, scoped, tag = 'scoped memory for tpu_custom_call.1']
    #allocation5 [shape = 'u8[8192]{0}', space=vmem, size = 0x2000, scoped, tag = 'input window, operand 1, single buffered']
    #allocation6 [shape = 's32[1]{0}', space=sflag, size = 0x4, scoped, tag = 'scoped memory for tpu_custom_call.1']
    #allocation7 [shape = 'u8[262144]{0}', space=vmem, size = 0x40000, scoped, tag = 'input window, operand 2, single buffered']
    #allocation8 [shape = 'u8[262144]{0}', space=vmem, size = 0x40000, scoped, tag = 'input window, operand 3, single buffered']
    #allocation9 [shape = 's32[1]{0}', space=sflag, size = 0x4, scoped, tag = 'scoped memory for tpu_custom_call.1']
    #allocation10 [shape = 'u8[512]{0}', space=vmem, size = 0x400, scoped, tag = 'output window, operand 0, single buffered']
    %9 = vsyncpa [#allocation3], 0
    %10 = vsyncpa [#allocation6], 0
    %11 = vsyncpa [#allocation9], 0
    %12 = vsyncpa [#allocation4], 0
    // Predicated region
    $region2: #{tpu_custom_call.1} parent=1 // pred_check
      _
    $region3: #{tpu_custom_call.1} parent=1 // pred_check_branch
      %14 = sbr.rel (0) target = $region5
    $region4: #{tpu_custom_call.1} parent=1 // pred_region
      %s16 = ssub.s32 256, 256
      %17 = vsyncadd [#allocation3], %s16
      %s19 = sshll.u32 [#allocation2], 4
      %s20 = int_to_ptr.vmem [resolvable:$true] %s19
      %22 = dma.hbm_to_vmem [thread:$0]  %s0, 256, %s20, [#allocation3]
    $region5: #{tpu_custom_call.1} parent=1 // pred_fallthru
      _
    // Predicated region
    $region6: #{tpu_custom_call.1} parent=1 // pred_check
      _
    $region7: #{tpu_custom_call.1} parent=1 // pred_check_branch
      %24 = sbr.rel (0) target = $region9
    $region8: #{tpu_custom_call.1} parent=1 // pred_region
      %s26 = ssub.s32 256, 256
      %27 = vsyncadd [#allocation6], %s26
      %s29 = sshll.u32 [#allocation5], 4
      %s30 = int_to_ptr.vmem [resolvable:$true] %s29
      %32 = dma.hbm_to_vmem [thread:$0]  %s1, 256, %s30, [#allocation6]
    $region9: #{tpu_custom_call.1} parent=1 // pred_fallthru
      _
    // Predicated region
    $region10: #{tpu_custom_call.1} parent=1 // pred_check
      _
    $region11: #{tpu_custom_call.1} parent=1 // pred_check_branch
      %34 = sbr.rel (0) target = $region13
    $region12: #{tpu_custom_call.1} parent=1 // pred_region
      %s36 = ssub.s32 8192, 8192
      %37 = vsyncadd [#allocation6], %s36
      %s38 = sshll.u32 [#allocation7], 4
      %s39 = int_to_ptr.vmem [resolvable:$true] %s38
      %44 = dma.hbm_to_vmem [thread:$0]  %s2, 8192, %s39, [#allocation6], 256, 256, 16
    $region13: #{tpu_custom_call.1} parent=1 // pred_fallthru
      _
    // Predicated region
    $region14: #{tpu_custom_call.1} parent=1 // pred_check
      _
    $region15: #{tpu_custom_call.1} parent=1 // pred_check_branch
      %46 = sbr.rel (0) target = $region17
    $region16: #{tpu_custom_call.1} parent=1 // pred_region
      %s48 = ssub.s32 8192, 8192
      %49 = vsyncadd [#allocation9], %s48
      %s50 = sshll.u32 [#allocation8], 4
      %s51 = int_to_ptr.vmem [resolvable:$true] %s50
      %56 = dma.hbm_to_vmem [thread:$0]  %s3, 8192, %s51, [#allocation9], 256, 256, 16
    $region17: #{tpu_custom_call.1} parent=1 // pred_fallthru
      _
    // Predicated region
    $region18: #{tpu_custom_call.1} parent=1 // pred_check
      _
    $region19: #{tpu_custom_call.1} parent=1 // pred_check_branch
      %58 = sbr.rel (0) target = $region21
    $region20: #{tpu_custom_call.1} parent=1 // pred_region
      %59 = dma.done [#allocation3], 256
    $region21: #{tpu_custom_call.1} parent=1 // pred_fallthru
      _
    // Predicated region
    $region22: #{tpu_custom_call.1} parent=1 // pred_check
      _
    $region23: #{tpu_custom_call.1} parent=1 // pred_check_branch
      %61 = sbr.rel (0) target = $region25
    $region24: #{tpu_custom_call.1} parent=1 // pred_region
      %62 = dma.done [#allocation6], 256
    $region25: #{tpu_custom_call.1} parent=1 // pred_fallthru
      _
    // Predicated region
    $region26: #{tpu_custom_call.1} parent=1 // pred_check
      _
    $region27: #{tpu_custom_call.1} parent=1 // pred_check_branch
      %64 = sbr.rel (0) target = $region29
    $region28: #{tpu_custom_call.1} parent=1 // pred_region
      %65 = dma.done [#allocation6], 8192
    $region29: #{tpu_custom_call.1} parent=1 // pred_fallthru
      _
    // Predicated region
    $region30: #{tpu_custom_call.1} parent=1 // pred_check
      _
    $region31: #{tpu_custom_call.1} parent=1 // pred_check_branch
      %67 = sbr.rel (0) target = $region33
    $region32: #{tpu_custom_call.1} parent=1 // pred_region
      %68 = dma.done [#allocation9], 8192
    $region33: #{tpu_custom_call.1} parent=1 // pred_fallthru
      _
    %v69 = vld [vmem:[#allocation2] sm:$0xff]
    %v70 = vld [vmem:[#allocation2 + $0x8] sm:$0xff]
    %v71 = vld [vmem:[#allocation5] sm:$0xff]
    %v72 = vld [vmem:[#allocation5 + $0x8] sm:$0xff]
    %v73 = vsub.f32 %v69, %v71
    %v74 = vsub.f32 %v70, %v72
    %v75 = vld [vmem:[#allocation7] sm:$0xff]
    %v76 = vld [vmem:[#allocation7 + $0x8] sm:$0xff]
    %v77 = vld [vmem:[#allocation7 + $0x10] sm:$0xff]
    %v78 = vld [vmem:[#allocation7 + $0x18] sm:$0xff]
    %v79 = vld [vmem:[#allocation7 + $0x20] sm:$0xff]
    %v80 = vld [vmem:[#allocation7 + $0x28] sm:$0xff]
    %v81 = vld [vmem:[#allocation7 + $0x30] sm:$0xff]
    %v82 = vld [vmem:[#allocation7 + $0x38] sm:$0xff]
    %v83 = vld [vmem:[#allocation7 + $0x40] sm:$0xff]
    %v84 = vld [vmem:[#allocation7 + $0x48] sm:$0xff]
    %v85 = vld [vmem:[#allocation7 + $0x50] sm:$0xff]
    %v86 = vld [vmem:[#allocation7 + $0x58] sm:$0xff]
    %v87 = vld [vmem:[#allocation7 + $0x60] sm:$0xff]
    %v88 = vld [vmem:[#allocation7 + $0x68] sm:$0xff]
    %v89 = vld [vmem:[#allocation7 + $0x70] sm:$0xff]
    %v90 = vld [vmem:[#allocation7 + $0x78] sm:$0xff]
    %v91 = vld [vmem:[#allocation7 + $0x80] sm:$0xff]
    %v92 = vld [vmem:[#allocation7 + $0x88] sm:$0xff]
    %v93 = vld [vmem:[#allocation7 + $0x90] sm:$0xff]
    %v94 = vld [vmem:[#allocation7 + $0x98] sm:$0xff]
    %v95 = vld [vmem:[#allocation7 + $0xa0] sm:$0xff]
    %v96 = vld [vmem:[#allocation7 + $0xa8] sm:$0xff]
    %v97 = vld [vmem:[#allocation7 + $0xb0] sm:$0xff]
    %v98 = vld [vmem:[#allocation7 + $0xb8] sm:$0xff]
    %v99 = vld [vmem:[#allocation7 + $0xc0] sm:$0xff]
    %v100 = vld [vmem:[#allocation7 + $0xc8] sm:$0xff]
    %v101 = vld [vmem:[#allocation7 + $0xd0] sm:$0xff]
    %v102 = vld [vmem:[#allocation7 + $0xd8] sm:$0xff]
    %v103 = vld [vmem:[#allocation7 + $0xe0] sm:$0xff]
    %v104 = vld [vmem:[#allocation7 + $0xe8] sm:$0xff]
    %v105 = vld [vmem:[#allocation7 + $0xf0] sm:$0xff]
    %v106 = vld [vmem:[#allocation7 + $0xf8] sm:$0xff]
    %v107 = vld [vmem:[#allocation7 + $0x100] sm:$0xff]
    %v108 = vld [vmem:[#allocation7 + $0x108] sm:$0xff]
    %v109 = vld [vmem:[#allocation7 + $0x110] sm:$0xff]
    %v110 = vld [vmem:[#allocation7 + $0x118] sm:$0xff]
    %v111 = vld [vmem:[#allocation7 + $0x120] sm:$0xff]
    %v112 = vld [vmem:[#allocation7 + $0x128] sm:$0xff]
    %v113 = vld [vmem:[#allocation7 + $0x130] sm:$0xff]
    %v114 = vld [vmem:[#allocation7 + $0x138] sm:$0xff]
    %v115 = vld [vmem:[#allocation7 + $0x140] sm:$0xff]
    %v116 = vld [vmem:[#allocation7 + $0x148] sm:$0xff]
    %v117 = vld [vmem:[#allocation7 + $0x150] sm:$0xff]
    %v118 = vld [vmem:[#allocation7 + $0x158] sm:$0xff]
    %v119 = vld [vmem:[#allocation7 + $0x160] sm:$0xff]
    %v120 = vld [vmem:[#allocation7 + $0x168] sm:$0xff]
    %v121 = vld [vmem:[#allocation7 + $0x170] sm:$0xff]
    %v122 = vld [vmem:[#allocation7 + $0x178] sm:$0xff]
    %v123 = vld [vmem:[#allocation7 + $0x180] sm:$0xff]
    %v124 = vld [vmem:[#allocation7 + $0x188] sm:$0xff]
    %v125 = vld [vmem:[#allocation7 + $0x190] sm:$0xff]
    %v126 = vld [vmem:[#allocation7 + $0x198] sm:$0xff]
    %v127 = vld [vmem:[#allocation7 + $0x1a0] sm:$0xff]
    %v128 = vld [vmem:[#allocation7 + $0x1a8] sm:$0xff]
    %v129 = vld [vmem:[#allocation7 + $0x1b0] sm:$0xff]
    %v130 = vld [vmem:[#allocation7 + $0x1b8] sm:$0xff]
    %v131 = vld [vmem:[#allocation7 + $0x1c0] sm:$0xff]
    %v132 = vld [vmem:[#allocation7 + $0x1c8] sm:$0xff]
    %v133 = vld [vmem:[#allocation7 + $0x1d0] sm:$0xff]
    %v134 = vld [vmem:[#allocation7 + $0x1d8] sm:$0xff]
    %v135 = vld [vmem:[#allocation7 + $0x1e0] sm:$0xff]
    %v136 = vld [vmem:[#allocation7 + $0x1e8] sm:$0xff]
    %v137 = vld [vmem:[#allocation7 + $0x1f0] sm:$0xff]
    %v138 = vld [vmem:[#allocation7 + $0x1f8] sm:$0xff]
    %139 = vmatprep.subr.mxu0 %v76
    %140 = vmatpush1.msra.mxu0 %v75
    %141 = vmatprep.subr.mxu0 %v78
    %142 = vmatpush1.msra.mxu0 %v77
    %143 = vmatprep.subr.mxu0 %v80
    %144 = vmatpush1.msra.mxu0 %v79
    %145 = vmatprep.subr.mxu0 %v82
    %146 = vmatpush1.msra.mxu0 %v81
    %147 = vmatprep.subr.mxu0 %v84
    %148 = vmatpush1.msra.mxu0 %v83
    %149 = vmatprep.subr.mxu0 %v86
    %150 = vmatpush1.msra.mxu0 %v85
    %151 = vmatprep.subr.mxu0 %v88
    %152 = vmatpush1.msra.mxu0 %v87
    %153 = vmatprep.subr.mxu0 %v90
    %154 = vmatpush1.msra.mxu0 %v89
    %155 = vmatprep.subr.mxu0 %v92
    %156 = vmatpush1.msra.mxu0 %v91
    %157 = vmatprep.subr.mxu0 %v94
    %158 = vmatpush1.msra.mxu0 %v93
    %159 = vmatprep.subr.mxu0 %v96
    %160 = vmatpush1.msra.mxu0 %v95
    %161 = vmatprep.subr.mxu0 %v98
    %162 = vmatpush1.msra.mxu0 %v97
    %163 = vmatprep.subr.mxu0 %v100
    %164 = vmatpush1.msra.mxu0 %v99
    %165 = vmatprep.subr.mxu0 %v102
    %166 = vmatpush1.msra.mxu0 %v101
    %167 = vmatprep.subr.mxu0 %v104
    %168 = vmatpush1.msra.mxu0 %v103
    %169 = vmatprep.subr.mxu0 %v106
    %170 = vmatpush1.msra.mxu0 %v105
    %171 = vmatprep.subr.mxu0 %v108
    %172 = vmatpush1.msra.mxu0 %v107
    %173 = vmatprep.subr.mxu0 %v110
    %174 = vmatpush1.msra.mxu0 %v109
    %175 = vmatprep.subr.mxu0 %v112
    %176 = vmatpush1.msra.mxu0 %v111
    %177 = vmatprep.subr.mxu0 %v114
    %178 = vmatpush1.msra.mxu0 %v113
    %179 = vmatprep.subr.mxu0 %v116
    %180 = vmatpush1.msra.mxu0 %v115
    %181 = vmatprep.subr.mxu0 %v118
    %182 = vmatpush1.msra.mxu0 %v117
    %183 = vmatprep.subr.mxu0 %v120
    %184 = vmatpush1.msra.mxu0 %v119
    %185 = vmatprep.subr.mxu0 %v122
    %186 = vmatpush1.msra.mxu0 %v121
    %187 = vmatprep.subr.mxu0 %v124
    %188 = vmatpush1.msra.mxu0 %v123
    %189 = vmatprep.subr.mxu0 %v126
    %190 = vmatpush1.msra.mxu0 %v125
    %191 = vmatprep.subr.mxu0 %v128
    %192 = vmatpush1.msra.mxu0 %v127
    %193 = vmatprep.subr.mxu0 %v130
    %194 = vmatpush1.msra.mxu0 %v129
    %195 = vmatprep.subr.mxu0 %v132
    %196 = vmatpush1.msra.mxu0 %v131
    %197 = vmatprep.subr.mxu0 %v134
    %198 = vmatpush1.msra.mxu0 %v133
    %199 = vmatprep.subr.mxu0 %v136
    %200 = vmatpush1.msra.mxu0 %v135
    %201 = vmatprep.subr.mxu0 %v138
    %202 = vmatpush1.msra.mxu0 %v137
    %203 = vmatprep.mubr.f32.mxu0 %v74
    %204 = vmatmul.mubr.f32.gmra.mrb[0].mxu0 %v73
    %v205 = vpop.f32.mrb[0].mxu0
    %v206 = vadd.f32 0.0, %v205
    %v207 = vpop.f32.mrb[0].mxu0
    %v208 = vadd.f32 0.0, %v207
    %209 = vdwg.mxu0
    %v210 = vld [vmem:[#allocation8] sm:$0xff]
    %v211 = vld [vmem:[#allocation8 + $0x8] sm:$0xff]
    %v212 = vld [vmem:[#allocation8 + $0x10] sm:$0xff]
    %v213 = vld [vmem:[#allocation8 + $0x18] sm:$0xff]
    %v214 = vld [vmem:[#allocation8 + $0x20] sm:$0xff]
    %v215 = vld [vmem:[#allocation8 + $0x28] sm:$0xff]
    %v216 = vld [vmem:[#allocation8 + $0x30] sm:$0xff]
    %v217 = vld [vmem:[#allocation8 + $0x38] sm:$0xff]
    %v218 = vld [vmem:[#allocation8 + $0x40] sm:$0xff]
    %v219 = vld [vmem:[#allocation8 + $0x48] sm:$0xff]
    %v220 = vld [vmem:[#allocation8 + $0x50] sm:$0xff]
    %v221 = vld [vmem:[#allocation8 + $0x58] sm:$0xff]
    %v222 = vld [vmem:[#allocation8 + $0x60] sm:$0xff]
    %v223 = vld [vmem:[#allocation8 + $0x68] sm:$0xff]
    %v224 = vld [vmem:[#allocation8 + $0x70] sm:$0xff]
    %v225 = vld [vmem:[#allocation8 + $0x78] sm:$0xff]
    %v226 = vld [vmem:[#allocation8 + $0x80] sm:$0xff]
    %v227 = vld [vmem:[#allocation8 + $0x88] sm:$0xff]
    %v228 = vld [vmem:[#allocation8 + $0x90] sm:$0xff]
    %v229 = vld [vmem:[#allocation8 + $0x98] sm:$0xff]
    %v230 = vld [vmem:[#allocation8 + $0xa0] sm:$0xff]
    %v231 = vld [vmem:[#allocation8 + $0xa8] sm:$0xff]
    %v232 = vld [vmem:[#allocation8 + $0xb0] sm:$0xff]
    %v233 = vld [vmem:[#allocation8 + $0xb8] sm:$0xff]
    %v234 = vld [vmem:[#allocation8 + $0xc0] sm:$0xff]
    %v235 = vld [vmem:[#allocation8 + $0xc8] sm:$0xff]
    %v236 = vld [vmem:[#allocation8 + $0xd0] sm:$0xff]
    %v237 = vld [vmem:[#allocation8 + $0xd8] sm:$0xff]
    %v238 = vld [vmem:[#allocation8 + $0xe0] sm:$0xff]
    %v239 = vld [vmem:[#allocation8 + $0xe8] sm:$0xff]
    %v240 = vld [vmem:[#allocation8 + $0xf0] sm:$0xff]
    %v241 = vld [vmem:[#allocation8 + $0xf8] sm:$0xff]
    %v242 = vld [vmem:[#allocation8 + $0x100] sm:$0xff]
    %v243 = vld [vmem:[#allocation8 + $0x108] sm:$0xff]
    %v244 = vld [vmem:[#allocation8 + $0x110] sm:$0xff]
    %v245 = vld [vmem:[#allocation8 + $0x118] sm:$0xff]
    %v246 = vld [vmem:[#allocation8 + $0x120] sm:$0xff]
    %v247 = vld [vmem:[#allocation8 + $0x128] sm:$0xff]
    %v248 = vld [vmem:[#allocation8 + $0x130] sm:$0xff]
    %v249 = vld [vmem:[#allocation8 + $0x138] sm:$0xff]
    %v250 = vld [vmem:[#allocation8 + $0x140] sm:$0xff]
    %v251 = vld [vmem:[#allocation8 + $0x148] sm:$0xff]
    %v252 = vld [vmem:[#allocation8 + $0x150] sm:$0xff]
    %v253 = vld [vmem:[#allocation8 + $0x158] sm:$0xff]
    %v254 = vld [vmem:[#allocation8 + $0x160] sm:$0xff]
    %v255 = vld [vmem:[#allocation8 + $0x168] sm:$0xff]
    %v256 = vld [vmem:[#allocation8 + $0x170] sm:$0xff]
    %v257 = vld [vmem:[#allocation8 + $0x178] sm:$0xff]
    %v258 = vld [vmem:[#allocation8 + $0x180] sm:$0xff]
    %v259 = vld [vmem:[#allocation8 + $0x188] sm:$0xff]
    %v260 = vld [vmem:[#allocation8 + $0x190] sm:$0xff]
    %v261 = vld [vmem:[#allocation8 + $0x198] sm:$0xff]
    %v262 = vld [vmem:[#allocation8 + $0x1a0] sm:$0xff]
    %v263 = vld [vmem:[#allocation8 + $0x1a8] sm:$0xff]
    %v264 = vld [vmem:[#allocation8 + $0x1b0] sm:$0xff]
    %v265 = vld [vmem:[#allocation8 + $0x1b8] sm:$0xff]
    %v266 = vld [vmem:[#allocation8 + $0x1c0] sm:$0xff]
    %v267 = vld [vmem:[#allocation8 + $0x1c8] sm:$0xff]
    %v268 = vld [vmem:[#allocation8 + $0x1d0] sm:$0xff]
    %v269 = vld [vmem:[#allocation8 + $0x1d8] sm:$0xff]
    %v270 = vld [vmem:[#allocation8 + $0x1e0] sm:$0xff]
    %v271 = vld [vmem:[#allocation8 + $0x1e8] sm:$0xff]
    %v272 = vld [vmem:[#allocation8 + $0x1f0] sm:$0xff]
    %v273 = vld [vmem:[#allocation8 + $0x1f8] sm:$0xff]
    %274 = vmatprep.subr.mxu0 %v211
    %275 = vmatpush1.msra.mxu0 %v210
    %276 = vmatprep.subr.mxu0 %v213
    %277 = vmatpush1.msra.mxu0 %v212
    %278 = vmatprep.subr.mxu0 %v215
    %279 = vmatpush1.msra.mxu0 %v214
    %280 = vmatprep.subr.mxu0 %v217
    %281 = vmatpush1.msra.mxu0 %v216
    %282 = vmatprep.subr.mxu0 %v219
    %283 = vmatpush1.msra.mxu0 %v218
    %284 = vmatprep.subr.mxu0 %v221
    %285 = vmatpush1.msra.mxu0 %v220
    %286 = vmatprep.subr.mxu0 %v223
    %287 = vmatpush1.msra.mxu0 %v222
    %288 = vmatprep.subr.mxu0 %v225
    %289 = vmatpush1.msra.mxu0 %v224
    %290 = vmatprep.subr.mxu0 %v227
    %291 = vmatpush1.msra.mxu0 %v226
    %292 = vmatprep.subr.mxu0 %v229
    %293 = vmatpush1.msra.mxu0 %v228
    %294 = vmatprep.subr.mxu0 %v231
    %295 = vmatpush1.msra.mxu0 %v230
    %296 = vmatprep.subr.mxu0 %v233
    %297 = vmatpush1.msra.mxu0 %v232
    %298 = vmatprep.subr.mxu0 %v235
    %299 = vmatpush1.msra.mxu0 %v234
    %300 = vmatprep.subr.mxu0 %v237
    %301 = vmatpush1.msra.mxu0 %v236
    %302 = vmatprep.subr.mxu0 %v239
    %303 = vmatpush1.msra.mxu0 %v238
    %304 = vmatprep.subr.mxu0 %v241
    %305 = vmatpush1.msra.mxu0 %v240
    %306 = vmatprep.subr.mxu0 %v243
    %307 = vmatpush1.msra.mxu0 %v242
    %308 = vmatprep.subr.mxu0 %v245
    %309 = vmatpush1.msra.mxu0 %v244
    %310 = vmatprep.subr.mxu0 %v247
    %311 = vmatpush1.msra.mxu0 %v246
    %312 = vmatprep.subr.mxu0 %v249
    %313 = vmatpush1.msra.mxu0 %v248
    %314 = vmatprep.subr.mxu0 %v251
    %315 = vmatpush1.msra.mxu0 %v250
    %316 = vmatprep.subr.mxu0 %v253
    %317 = vmatpush1.msra.mxu0 %v252
    %318 = vmatprep.subr.mxu0 %v255
    %319 = vmatpush1.msra.mxu0 %v254
    %320 = vmatprep.subr.mxu0 %v257
    %321 = vmatpush1.msra.mxu0 %v256
    %322 = vmatprep.subr.mxu0 %v259
    %323 = vmatpush1.msra.mxu0 %v258
    %324 = vmatprep.subr.mxu0 %v261
    %325 = vmatpush1.msra.mxu0 %v260
    %326 = vmatprep.subr.mxu0 %v263
    %327 = vmatpush1.msra.mxu0 %v262
    %328 = vmatprep.subr.mxu0 %v265
    %329 = vmatpush1.msra.mxu0 %v264
    %330 = vmatprep.subr.mxu0 %v267
    %331 = vmatpush1.msra.mxu0 %v266
    %332 = vmatprep.subr.mxu0 %v269
    %333 = vmatpush1.msra.mxu0 %v268
    %334 = vmatprep.subr.mxu0 %v271
    %335 = vmatpush1.msra.mxu0 %v270
    %336 = vmatprep.subr.mxu0 %v273
    %337 = vmatpush1.msra.mxu0 %v272
    %338 = vmatprep.mubr.f32.mxu0 %v74
    %339 = vmatmul.mubr.f32.gmra.mrb[0].mxu0 %v73
    %v340 = vpop.f32.mrb[0].mxu0
    %v341 = vadd.f32 0.0, %v340
    %v342 = vpop.f32.mrb[0].mxu0
    %v343 = vadd.f32 0.0, %v342
    %344 = vdwg.mxu0
    %v345 = vmul.f32 %v206, %v206
    %v346 = vmul.f32 %v208, %v208
    %v347 = vmul.f32 %v341, %v341
    %v348 = vmul.f32 %v343, %v343
    %v349 = vadd.f32 %v345, %v347
    %v350 = vadd.f32 %v346, %v348
    %v351 = vrsqrt.pop %v349
    %v352 = vmul.f32 %v349, %v351
    %vm353 = vcmp.eq.f32.partialorder %v349, inf
    %v354 = vsel %vm353, %v349, %v352
    %vm355 = vcmp.eq.f32.partialorder %v349, 0.0
    %v356 = vand.u32 %v349, 2147483648
    %v357 = vsel %vm355, %v356, %v354
    %v358 = vrsqrt.pop %v350
    %v359 = vmul.f32 %v350, %v358
    %vm360 = vcmp.eq.f32.partialorder %v350, inf
    %v361 = vsel %vm360, %v350, %v359
    %vm362 = vcmp.eq.f32.partialorder %v350, 0.0
    %v363 = vand.u32 %v350, 2147483648
    %v364 = vsel %vm362, %v363, %v361
    %v365 = vmax.f32 %v357, %v364
    %366 = vmax.xlane.f32.xlu0 %v365
    %v367 = vpop.xlane.xlu0 %366
    %vm368 = vcmp.gt.f32.partialorder %v367, 0.0
    %v369 = vrcp.pop %v367
    %v370 = vmul.f32 1.0, %v369
    %v371 = vsel %vm368, %v370, 0.0
    %v372 = vmul.f32 %v357, %v371
    %v373 = vmul.f32 %v364, %v371
    %v374 = vmax.f32 %v372, 0.0
    %v375 = vmax.f32 %v373, 0.0
    %v376 = vmin.f32 %v374, 1.0
    %v377 = vmin.f32 %v375, 1.0
    %v378 = vmul.f32 %v376, %v349
    %v379 = vmul.f32 %v377, %v350
    %v380 = vadd.f32 %v378, %v379
    %381 = vadd.xlane.f32.xlu0 %v380
    %v382 = vpop.xlane.xlu0 %381
    %v383 = vrot.slane %v382, 4
    %v384 = vadd.f32 %v382, %v383
    %v385 = vrot.slane %v384, 2
    %v386 = vadd.f32 %v384, %v385
    %v387 = vrot.slane %v386, 1
    %v388 = vadd.f32 %v386, %v387
    %s389 = vtos %v388
    %v390 = vstv %s389
    %v391 = vadd.f32 %v390, 0.0
    %392 = vst [vmem:[#allocation10] sm:$0x1] %v391
    // Predicated region
    $region34: #{tpu_custom_call.1} parent=1 // pred_check
      _
    $region35: #{tpu_custom_call.1} parent=1 // pred_check_branch
      %394 = sbr.rel (0) target = $region37
    $region36: #{tpu_custom_call.1} parent=1 // pred_region
      %s396 = ssub.s32 16, 16
      %397 = vsyncadd [#allocation4], %s396
      %s399 = sshll.u32 [#allocation10], 4
      %s400 = int_to_ptr.vmem [resolvable:$true] %s399
      %402 = dma.vmem_to_hbm [thread:$0]  %s400, 16, %s4, [#allocation4]
    $region37: #{tpu_custom_call.1} parent=1 // pred_fallthru
      _
    // Predicated region
    $region38: #{tpu_custom_call.1} parent=1 // pred_check
      _
    $region39: #{tpu_custom_call.1} parent=1 // pred_check_branch
      %404 = sbr.rel (0) target = $region41
    $region40: #{tpu_custom_call.1} parent=1 // pred_region
      %405 = dma.done [#allocation4], 16
    $region41: #{tpu_custom_call.1} parent=1 // pred_fallthru
      _
    %406 = vsyncpa [#allocation3], 1
    %407 = vsyncpa [#allocation6], 1
    %408 = vsyncpa [#allocation9], 1
    %409 = vsyncpa [#allocation4], 1

</llo_original>
